<compile_context>
chip_gen: v7x
topology: tpu7x:2x2x1
jax: 0.10.0
libtpu: 0.0.40
codegen_flags: <defaults>
</compile_context>

<pallas_src>
import functools

import jax
import jax.numpy as jnp
from jax.experimental import pallas as pl
from jax.experimental.pallas import tpu as pltpu


_VMEM_LIMIT_BYTES = 48 * 1024 * 1024  # below v7x's 64 MiB physical VMEM


# ---------------------------------------------------------------------------
# Shared math helpers (used inside kernels and in the pure-JAX reference)
# ---------------------------------------------------------------------------
def _layernorm(t, gamma, beta, eps=1e-5):
    mu = jnp.mean(t, axis=-1, keepdims=True)
    var = jnp.mean((t - mu) ** 2, axis=-1, keepdims=True)
    return (t - mu) * jax.lax.rsqrt(var + eps) * gamma + beta


def _rope_rotate(t, cos_full, sin_full):
    """Interleaved-pair rotation on (rows, H*Hd) -- torch.view_as_complex math.

    Tables are pre-expanded per column:
      cos_full[:, 2i] = cos_full[:, 2i+1] = cos(theta_i)
      sin_full[:, 2i] = -sin(theta_i),  sin_full[:, 2i+1] = +sin(theta_i)
    so  out[2i]   = t[2i]*cos - t[2i+1]*sin
        out[2i+1] = t[2i+1]*cos + t[2i]*sin
    """
    col = jax.lax.broadcasted_iota(jnp.int32, t.shape, t.ndim - 1)
    partner = jnp.where(col % 2 == 0,
                        jnp.roll(t, -1, axis=-1),
                        jnp.roll(t, 1, axis=-1))
    return t * cos_full + partner * sin_full


# ---------------------------------------------------------------------------
# Kernel 1: fused QKV projection + LayerNorm(q,k) + RoPE + head-split layout
# ---------------------------------------------------------------------------
def qkv_ln_rope_kernel(x_ref, wqkv_ref, gq_ref, bq_ref, gk_ref, bk_ref,
                       *rest, num_heads, head_dim, use_rope, q_scale):
    if use_rope:
        cos_ref, sin_ref, q_ref, k_ref, v_ref = rest
    else:
        q_ref, k_ref, v_ref = rest

    inner = num_heads * head_dim
    x = x_ref[0]                                        # (ts, D) bf16
    # Single wide MXU pass (bf16 inputs, f32 accumulation).
    qkv = jnp.dot(x, wqkv_ref[...], preferred_element_type=jnp.float32)

    q = _layernorm(qkv[:, :inner], gq_ref[...], bq_ref[...])
    k = _layernorm(qkv[:, inner:2 * inner], gk_ref[...], bk_ref[...])
    v = qkv[:, 2 * inner:]

    if use_rope:
        cos = cos_ref[...]
        sin = sin_ref[...]
        q = _rope_rotate(q, cos, sin)
        k = _rope_rotate(k, cos, sin)

    # Fold the SDPA scale into Q once here (linear, commutes with RoPE), so
    # kernel 2 never multiplies the (H, tq, tkv) score tensor on the VPU.
    if q_scale != 1.0:
        q = q * q_scale

    # Emit (B, H, S, Hd) layout directly (bf16) so kernel 2 never transposes.
    for h in range(num_heads):
        sl = slice(h * head_dim, (h + 1) * head_dim)
        q_ref[0, h] = q[:, sl].astype(q_ref.dtype)
        k_ref[0, h] = k[:, sl].astype(k_ref.dtype)
        v_ref[0, h] = v[:, sl].astype(v_ref.dtype)


# ---------------------------------------------------------------------------
# Kernel 2: flash attention (online softmax over KV tiles) + fused out-proj
# ---------------------------------------------------------------------------
def flash_attn_out_kernel(q_ref, k_ref, v_ref, wo_ref, o_ref,
                          m_sc, l_sc, acc_sc, *, num_heads):
    ki = pl.program_id(2)

    @pl.when(ki == 0)
    def _():
        m_sc[...] = jnp.full(m_sc.shape, -jnp.inf, m_sc.dtype)
        l_sc[...] = jnp.zeros(l_sc.shape, l_sc.dtype)
        acc_sc[...] = jnp.zeros(acc_sc.shape, acc_sc.dtype)

    q = q_ref[0]                                        # (H, tq,  Hd) bf16
    k = k_ref[0]                                        # (H, tkv, Hd) bf16
    v = v_ref[0]                                        # (H, tkv, Hd) bf16

    # Batched over heads; contracts last dims directly (no k.T transpose).
    # Scale was already folded into q by kernel 1.
    s = jnp.einsum("hqd,hkd->hqk", q, k,
                   preferred_element_type=jnp.float32)  # (H, tq, tkv) f32

    m_prev = m_sc[...]
    m_new = jnp.maximum(m_prev, jnp.max(s, axis=-1, keepdims=True))
    alpha = jnp.exp(m_prev - m_new)
    p = jnp.exp(s - m_new)
    l_sc[...] = alpha * l_sc[...] + jnp.sum(p, axis=-1, keepdims=True)
    acc_sc[...] = alpha * acc_sc[...] + jnp.einsum(
        "hqk,hkd->hqd", p.astype(v.dtype), v,
        preferred_element_type=jnp.float32)
    m_sc[...] = m_new

    @pl.when(ki == pl.num_programs(2) - 1)
    def _():
        inv_l = pl.reciprocal(l_sc[...], approx=True)   # (H, tq, 1) on EUP
        out = None
        for h in range(num_heads):
            o_h = (acc_sc[h] * inv_l[h]).astype(jnp.bfloat16)
            part = jnp.dot(o_h, wo_ref[h], preferred_element_type=jnp.float32)
            out = part if out is None else out + part
        o_ref[0] = out.astype(o_ref.dtype)              # lane-dense (tq, D)


# ---------------------------------------------------------------------------
# Host-side helpers
# ---------------------------------------------------------------------------
def _pick_tile(size, target=256):
    if size <= target:
        return size
    for t in range(target, 7, -8):
        if size % t == 0:
            return t
    return size


def _expand_rope_tables(cos, sin, num_heads):
    # cos, sin: (S, Hd//2) -> full-width interleaved, signed tables (S, H*Hd)
    cos2 = jnp.repeat(cos, 2, axis=-1)                  # [c0,c0,c1,c1,...]
    sin2 = jnp.repeat(sin, 2, axis=-1)
    sign = jnp.tile(jnp.array([-1.0, 1.0], cos.dtype), cos.shape[-1])
    return (jnp.tile(cos2, (1, num_heads)).astype(jnp.float32),
            jnp.tile(sin2 * sign[None, :], (1, num_heads)).astype(jnp.float32))


# ---------------------------------------------------------------------------
# Full forward pass (Pallas)
# ---------------------------------------------------------------------------
def attention_forward(x, params, cos=None, sin=None, num_heads=1,
                      scale_by_num_heads=False,
                      seq_tile=256, q_tile=256, kv_tile=256):
    B, S, D = x.shape
    head_dim = D // num_heads
    inner = head_dim * num_heads
    scale = 1.0 / (head_dim ** 0.5) if scale_by_num_heads else 1.0
    use_rope = cos is not None

    ts = _pick_tile(S, seq_tile)
    tq = _pick_tile(S, q_tile)
    tkv = _pick_tile(S, kv_tile)

    # Fuse QKV into one lane-dense weight; per-head output weight for fusion.
    wqkv = jnp.concatenate([params["wq"], params["wk"], params["wv"]],
                           axis=1).astype(jnp.bfloat16)          # (D, 3*inner)
    wo_h = params["wo"].reshape(num_heads, head_dim, D).astype(jnp.bfloat16)

    x_bf = x.astype(jnp.bfloat16)

    const2 = lambda b, si: (0, 0)
    qkv_out = jax.ShapeDtypeStruct((B, num_heads, S, head_dim), jnp.bfloat16)
    head_spec = pl.BlockSpec((1, num_heads, ts, head_dim),
                             lambda b, si: (b, 0, si, 0))

    in_specs_1 = [
        pl.BlockSpec((1, ts, D), lambda b, si: (b, si, 0)),
        pl.BlockSpec((D, 3 * inner), const2),
        pl.BlockSpec((1, inner), const2),   # gamma_q
        pl.BlockSpec((1, inner), const2),   # beta_q
        pl.BlockSpec((1, inner), const2),   # gamma_k
        pl.BlockSpec((1, inner), const2),   # beta_k
    ]
    args_1 = [x_bf, wqkv, params["gq"], params["bq"], params["gk"], params["bk"]]

    if use_rope:
        cos_full, sin_full = _expand_rope_tables(cos, sin, num_heads)
        rope_spec = pl.BlockSpec((ts, inner), lambda b, si: (si, 0))
        in_specs_1 += [rope_spec, rope_spec]
        args_1 += [cos_full, sin_full]

    q, k, v = pl.pallas_call(
        functools.partial(qkv_ln_rope_kernel, num_heads=num_heads,
                          head_dim=head_dim, use_rope=use_rope,
                          q_scale=scale),
        out_shape=(qkv_out, qkv_out, qkv_out),
        grid_spec=pltpu.PrefetchScalarGridSpec(
            num_scalar_prefetch=0,
            grid=(B, S // ts),
            in_specs=in_specs_1,
            out_specs=[head_spec, head_spec, head_spec],
        ),
        compiler_params=pltpu.CompilerParams(
            dimension_semantics=("parallel", "parallel"),
            vmem_limit_bytes=_VMEM_LIMIT_BYTES),
    )(*args_1)

    q_spec = pl.BlockSpec((1, num_heads, tq, head_dim),
                          lambda b, qi, ki: (b, 0, qi, 0))
    kv_spec = pl.BlockSpec((1, num_heads, tkv, head_dim),
                           lambda b, qi, ki: (b, 0, ki, 0))

    out = pl.pallas_call(
        functools.partial(flash_attn_out_kernel, num_heads=num_heads),
        out_shape=jax.ShapeDtypeStruct((B, S, D), x.dtype),
        grid_spec=pltpu.PrefetchScalarGridSpec(
            num_scalar_prefetch=0,
            grid=(B, S // tq, S // tkv),
            in_specs=[
                q_spec, kv_spec, kv_spec,
                pl.BlockSpec((num_heads, head_dim, D),
                             lambda b, qi, ki: (0, 0, 0)),
            ],
            out_specs=pl.BlockSpec((1, tq, D), lambda b, qi, ki: (b, qi, 0)),
            scratch_shapes=[
                pltpu.VMEM((num_heads, tq, 1), jnp.float32),        # m
                pltpu.VMEM((num_heads, tq, 1), jnp.float32),        # l
                pltpu.VMEM((num_heads, tq, head_dim), jnp.float32), # acc
            ],
        ),
        compiler_params=pltpu.CompilerParams(
            dimension_semantics=("parallel", "parallel", "arbitrary"),
            vmem_limit_bytes=_VMEM_LIMIT_BYTES),
    )(q, k, v, wo_h)
    return out


# ---------------------------------------------------------------------------
# Pure-JAX (float32) reference, mirroring the PyTorch module
# ---------------------------------------------------------------------------
def _apply_rope_ref(t, cos, sin):
    # t: (B, S, H, Hd);  cos, sin: (S, Hd//2)
    B, S, H, Hd = t.shape
    tr = t.reshape(B, S, H, Hd // 2, 2)
    t0, t1 = tr[..., 0], tr[..., 1]
    c = cos[None, :, None, :]
    s = sin[None, :, None, :]
    o0 = t0 * c - t1 * s
    o1 = t0 * s + t1 * c
    return jnp.stack([o0, o1], axis=-1).reshape(B, S, H, Hd)


def attention_reference(x, params, cos, sin, num_heads, scale_by_num_heads=False):
    B, S, D = x.shape
    head_dim = D // num_heads
    scale = 1.0 / (head_dim ** 0.5) if scale_by_num_heads else 1.0

    q = _layernorm(x @ params["wq"], params["gq"], params["bq"])
    k = _layernorm(x @ params["wk"], params["gk"], params["bk"])
    v = x @ params["wv"]

    q = q.reshape(B, S, num_heads, head_dim)
    k = k.reshape(B, S, num_heads, head_dim)
    v = v.reshape(B, S, num_heads, head_dim)
    if cos is not None:
        q = _apply_rope_ref(q, cos, sin)
        k = _apply_rope_ref(k, cos, sin)

    qh = jnp.transpose(q, (0, 2, 1, 3))
    kh = jnp.transpose(k, (0, 2, 1, 3))
    vh = jnp.transpose(v, (0, 2, 1, 3))
    s = jnp.einsum("bhqd,bhkd->bhqk", qh, kh) * scale
    p = jax.nn.softmax(s, axis=-1)
    o = jnp.einsum("bhqk,bhkd->bhqd", p, vh)
    o = jnp.transpose(o, (0, 2, 1, 3)).reshape(B, S, D)
    return o @ params["wo"]


# ---------------------------------------------------------------------------
if __name__ == "__main__":
    B, S, DIM, NUM_HEADS = 2, 8, 32, 4
    HEAD_DIM = DIM // NUM_HEADS
    INNER_DIM = HEAD_DIM * NUM_HEADS

    key = jax.random.PRNGKey(0)
    kx, kq, kk, kv, ko = jax.random.split(key, 5)
    x = jax.random.normal(kx, (B, S, DIM), dtype=jnp.float32)

    # nn.Linear-like uniform init (bias=False); stored (in, out) for x @ W.
    def linear_w(k, fan_in, fan_out):
        bound = 1.0 / (fan_in ** 0.5)
        return jax.random.uniform(k, (fan_in, fan_out), jnp.float32, -bound, bound)

    params = {
        "wq": linear_w(kq, DIM, INNER_DIM),
        "wk": linear_w(kk, DIM, INNER_DIM),
        "wv": linear_w(kv, DIM, INNER_DIM),
        "wo": linear_w(ko, INNER_DIM, DIM),
        # LayerNorm affine params (PyTorch default init): gamma=1, beta=0.
        "gq": jnp.ones((1, INNER_DIM), jnp.float32),
        "bq": jnp.zeros((1, INNER_DIM), jnp.float32),
        "gk": jnp.ones((1, INNER_DIM), jnp.float32),
        "bk": jnp.zeros((1, INNER_DIM), jnp.float32),
    }

    # RoPE "cis" frequencies as real cos/sin tables, shape (S, HEAD_DIM//2).
    inv_freq = 1.0 / (10000.0 ** (jnp.arange(0, HEAD_DIM, 2, dtype=jnp.float32)
                                  / HEAD_DIM))
    angles = jnp.arange(S, dtype=jnp.float32)[:, None] * inv_freq[None, :]
    cos_f, sin_f = jnp.cos(angles), jnp.sin(angles)

    # Case 1: RoPE enabled, scaled attention.
    out = attention_forward(x, params, cos_f, sin_f, NUM_HEADS,
                            scale_by_num_heads=True)
    out = jax.block_until_ready(out)
    ref = attention_reference(x, params, cos_f, sin_f, NUM_HEADS,
                              scale_by_num_heads=True)
    assert out.shape == (B, S, DIM)
    err = float(jnp.max(jnp.abs(out - ref)))
    assert jnp.allclose(out, ref, atol=5e-2, rtol=5e-2), (
        f"mismatch vs reference (RoPE): max abs err {err:.4f}")

    # Case 2: no frequencies (f=None), module-default unscaled attention.
    out2 = attention_forward(x, params, None, None, NUM_HEADS,
                             scale_by_num_heads=False)
    out2 = jax.block_until_ready(out2)
    ref2 = attention_reference(x, params, None, None, NUM_HEADS,
                               scale_by_num_heads=False)
    err2 = float(jnp.max(jnp.abs(out2 - ref2)))
    assert jnp.allclose(out2, ref2, atol=1e-1, rtol=1e-1), (
        f"mismatch vs reference (no RoPE): max abs err {err2:.4f}")

    print("KERNEL_OK")
</pallas_src>

<mosaic_0001>
module attributes {stable_mosaic.version = 11 : i64} {
  func.func @qkv_ln_rope_kernel(%arg0: i32, %arg1: i32, %arg2: memref<1x8x32xbf16, #tpu.memory_space<vmem>>, %arg3: memref<32x96xbf16, #tpu.memory_space<vmem>>, %arg4: memref<1x32xf32, #tpu.memory_space<vmem>>, %arg5: memref<1x32xf32, #tpu.memory_space<vmem>>, %arg6: memref<1x32xf32, #tpu.memory_space<vmem>>, %arg7: memref<1x32xf32, #tpu.memory_space<vmem>>, %arg8: memref<8x32xf32, #tpu.memory_space<vmem>>, %arg9: memref<8x32xf32, #tpu.memory_space<vmem>>, %arg10: memref<1x4x8x8xbf16, #tpu.memory_space<vmem>>, %arg11: memref<1x4x8x8xbf16, #tpu.memory_space<vmem>>, %arg12: memref<1x4x8x8xbf16, #tpu.memory_space<vmem>>) attributes {dimension_semantics = [#tpu.dimension_semantics<parallel>, #tpu.dimension_semantics<parallel>], iteration_bounds = array<i64: 2, 1>, scalar_prefetch = 0 : i64, scratch_operands = 0 : i64, tpu.core_type = #tpu.core_type<tc>, window_params = [{transform_indices = @transform_0, window_bounds = array<i64: 1, 8, 32>}, {pipeline_mode = #tpu.pipeline_mode<synchronous>, transform_indices = @transform_1, window_bounds = array<i64: 32, 96>}, {pipeline_mode = #tpu.pipeline_mode<synchronous>, transform_indices = @transform_2, window_bounds = array<i64: 1, 32>}, {pipeline_mode = #tpu.pipeline_mode<synchronous>, transform_indices = @transform_3, window_bounds = array<i64: 1, 32>}, {pipeline_mode = #tpu.pipeline_mode<synchronous>, transform_indices = @transform_4, window_bounds = array<i64: 1, 32>}, {pipeline_mode = #tpu.pipeline_mode<synchronous>, transform_indices = @transform_5, window_bounds = array<i64: 1, 32>}, {transform_indices = @transform_6, window_bounds = array<i64: 8, 32>}, {transform_indices = @transform_7, window_bounds = array<i64: 8, 32>}, {transform_indices = @transform_8, window_bounds = array<i64: 1, 4, 8, 8>}, {transform_indices = @transform_9, window_bounds = array<i64: 1, 4, 8, 8>}, {transform_indices = @transform_10, window_bounds = array<i64: 1, 4, 8, 8>}]} {
    %c0 = arith.constant 0 : index
    %c0_0 = arith.constant 0 : index
    %c0_1 = arith.constant 0 : index
    %0 = vector.load %arg2[%c0, %c0_0, %c0_1] : memref<1x8x32xbf16, #tpu.memory_space<vmem>>, vector<1x8x32xbf16>
    %1 = vector.shape_cast %0 : vector<1x8x32xbf16> to vector<8x32xbf16>
    %c0_2 = arith.constant 0 : index
    %c0_3 = arith.constant 0 : index
    %2 = vector.load %arg3[%c0_2, %c0_3] : memref<32x96xbf16, #tpu.memory_space<vmem>>, vector<32x96xbf16>
    %cst = arith.constant dense<0.000000e+00> : vector<8x96xf32>
    %3 = tpu.matmul %1, %2, %cst {dimension_numbers = #tpu.dot_dimension_numbers<[1], [0], [0], [1], [0, 0, 1, 1], [], []>} : vector<8x32xbf16>, vector<32x96xbf16>, vector<8x96xf32> -> vector<8x96xf32>
    %4 = vector.extract_strided_slice %3 {offsets = [0, 0], sizes = [8, 32], strides = [1, 1]} : vector<8x96xf32> to vector<8x32xf32>
    %c0_4 = arith.constant 0 : index
    %c0_5 = arith.constant 0 : index
    %5 = vector.load %arg4[%c0_4, %c0_5] : memref<1x32xf32, #tpu.memory_space<vmem>>, vector<1x32xf32>
    %c0_6 = arith.constant 0 : index
    %c0_7 = arith.constant 0 : index
    %6 = vector.load %arg5[%c0_6, %c0_7] : memref<1x32xf32, #tpu.memory_space<vmem>>, vector<1x32xf32>
    %cst_8 = arith.constant dense<0.000000e+00> : vector<8xf32>
    %7 = vector.multi_reduction <add>, %4, %cst_8 [1] : vector<8x32xf32> to vector<8xf32>
    %8 = vector.shape_cast %7 : vector<8xf32> to vector<8x1xf32>
    %cst_9 = arith.constant 3.200000e+01 : f32
    %9 = vector.broadcast %cst_9 : f32 to vector<8x1xf32>
    %10 = arith.divf %8, %9 : vector<8x1xf32>
    %11 = vector.broadcast %10 : vector<8x1xf32> to vector<8x32xf32>
    %12 = arith.subf %4, %11 : vector<8x32xf32>
    %13 = arith.mulf %12, %12 : vector<8x32xf32>
    %cst_10 = arith.constant dense<0.000000e+00> : vector<8xf32>
    %14 = vector.multi_reduction <add>, %13, %cst_10 [1] : vector<8x32xf32> to vector<8xf32>
    %15 = vector.shape_cast %14 : vector<8xf32> to vector<8x1xf32>
    %cst_11 = arith.constant 3.200000e+01 : f32
    %16 = vector.broadcast %cst_11 : f32 to vector<8x1xf32>
    %17 = arith.divf %15, %16 : vector<8x1xf32>
    %18 = vector.broadcast %10 : vector<8x1xf32> to vector<8x32xf32>
    %19 = arith.subf %4, %18 : vector<8x32xf32>
    %cst_12 = arith.constant 9.99999974E-6 : f32
    %20 = vector.broadcast %cst_12 : f32 to vector<8x1xf32>
    %21 = arith.addf %17, %20 : vector<8x1xf32>
    %22 = math.rsqrt %21 : vector<8x1xf32>
    %23 = vector.broadcast %22 : vector<8x1xf32> to vector<8x32xf32>
    %24 = arith.mulf %19, %23 : vector<8x32xf32>
    %25 = vector.broadcast %5 : vector<1x32xf32> to vector<8x32xf32>
    %26 = arith.mulf %24, %25 : vector<8x32xf32>
    %27 = vector.broadcast %6 : vector<1x32xf32> to vector<8x32xf32>
    %28 = arith.addf %26, %27 : vector<8x32xf32>
    %29 = vector.extract_strided_slice %3 {offsets = [0, 32], sizes = [8, 32], strides = [1, 1]} : vector<8x96xf32> to vector<8x32xf32>
    %c0_13 = arith.constant 0 : index
    %c0_14 = arith.constant 0 : index
    %30 = vector.load %arg6[%c0_13, %c0_14] : memref<1x32xf32, #tpu.memory_space<vmem>>, vector<1x32xf32>
    %c0_15 = arith.constant 0 : index
    %c0_16 = arith.constant 0 : index
    %31 = vector.load %arg7[%c0_15, %c0_16] : memref<1x32xf32, #tpu.memory_space<vmem>>, vector<1x32xf32>
    %cst_17 = arith.constant dense<0.000000e+00> : vector<8xf32>
    %32 = vector.multi_reduction <add>, %29, %cst_17 [1] : vector<8x32xf32> to vector<8xf32>
    %33 = vector.shape_cast %32 : vector<8xf32> to vector<8x1xf32>
    %cst_18 = arith.constant 3.200000e+01 : f32
    %34 = vector.broadcast %cst_18 : f32 to vector<8x1xf32>
    %35 = arith.divf %33, %34 : vector<8x1xf32>
    %36 = vector.broadcast %35 : vector<8x1xf32> to vector<8x32xf32>
    %37 = arith.subf %29, %36 : vector<8x32xf32>
    %38 = arith.mulf %37, %37 : vector<8x32xf32>
    %cst_19 = arith.constant dense<0.000000e+00> : vector<8xf32>
    %39 = vector.multi_reduction <add>, %38, %cst_19 [1] : vector<8x32xf32> to vector<8xf32>
    %40 = vector.shape_cast %39 : vector<8xf32> to vector<8x1xf32>
    %cst_20 = arith.constant 3.200000e+01 : f32
    %41 = vector.broadcast %cst_20 : f32 to vector<8x1xf32>
    %42 = arith.divf %40, %41 : vector<8x1xf32>
    %43 = vector.broadcast %35 : vector<8x1xf32> to vector<8x32xf32>
    %44 = arith.subf %29, %43 : vector<8x32xf32>
    %cst_21 = arith.constant 9.99999974E-6 : f32
    %45 = vector.broadcast %cst_21 : f32 to vector<8x1xf32>
    %46 = arith.addf %42, %45 : vector<8x1xf32>
    %47 = math.rsqrt %46 : vector<8x1xf32>
    %48 = vector.broadcast %47 : vector<8x1xf32> to vector<8x32xf32>
    %49 = arith.mulf %44, %48 : vector<8x32xf32>
    %50 = vector.broadcast %30 : vector<1x32xf32> to vector<8x32xf32>
    %51 = arith.mulf %49, %50 : vector<8x32xf32>
    %52 = vector.broadcast %31 : vector<1x32xf32> to vector<8x32xf32>
    %53 = arith.addf %51, %52 : vector<8x32xf32>
    %54 = vector.extract_strided_slice %3 {offsets = [0, 64], sizes = [8, 32], strides = [1, 1]} : vector<8x96xf32> to vector<8x32xf32>
    %c0_22 = arith.constant 0 : index
    %c0_23 = arith.constant 0 : index
    %55 = vector.load %arg8[%c0_22, %c0_23] : memref<8x32xf32, #tpu.memory_space<vmem>>, vector<8x32xf32>
    %c0_24 = arith.constant 0 : index
    %c0_25 = arith.constant 0 : index
    %56 = vector.load %arg9[%c0_24, %c0_25] : memref<8x32xf32, #tpu.memory_space<vmem>>, vector<8x32xf32>
    %57 = tpu.iota {dimensions = array<i32: 1>} : vector<8x32xi32>
    %c2_i32 = arith.constant 2 : i32
    %c0_i32 = arith.constant 0 : i32
    %58 = arith.cmpi eq, %c2_i32, %c0_i32 : i32
    %c1_i32 = arith.constant 1 : i32
    %59 = arith.select %58, %c1_i32, %c2_i32 : i32
    %60 = vector.broadcast %59 : i32 to vector<8x32xi32>
    %61 = arith.remsi %57, %60 : vector<8x32xi32>
    %c0_i32_26 = arith.constant 0 : i32
    %62 = vector.broadcast %c0_i32_26 : i32 to vector<8x32xi32>
    %63 = arith.cmpi ne, %61, %62 : vector<8x32xi32>
    %c0_i32_27 = arith.constant 0 : i32
    %64 = vector.broadcast %c0_i32_27 : i32 to vector<8x32xi32>
    %65 = arith.cmpi slt, %61, %64 : vector<8x32xi32>
    %c0_i32_28 = arith.constant 0 : i32
    %66 = arith.cmpi slt, %59, %c0_i32_28 : i32
    %67 = vector.broadcast %66 : i1 to vector<8x32xi1>
    %68 = vector.broadcast %67 : vector<8x32xi1> to vector<8x32xi1>
    %69 = arith.xori %65, %68 : vector<8x32xi1>
    %70 = arith.andi %69, %63 : vector<8x32xi1>
    %71 = vector.broadcast %59 : i32 to vector<8x32xi32>
    %72 = arith.addi %61, %71 : vector<8x32xi32>
    %73 = arith.select %70, %72, %61 : vector<8x32xi1>, vector<8x32xi32>
    %c0_i32_29 = arith.constant 0 : i32
    %74 = vector.broadcast %c0_i32_29 : i32 to vector<8x32xi32>
    %75 = arith.cmpi eq, %73, %74 : vector<8x32xi32>
    %76 = vector.extract_strided_slice %28 {offsets = [0, 1], sizes = [8, 31], strides = [1, 1]} : vector<8x32xf32> to vector<8x31xf32>
    %77 = vector.extract_strided_slice %28 {offsets = [0, 0], sizes = [8, 1], strides = [1, 1]} : vector<8x32xf32> to vector<8x1xf32>
    %78 = tpu.concatenate %76, %77 in 1 : vector<8x31xf32>, vector<8x1xf32> -> vector<8x32xf32>
    %79 = vector.extract_strided_slice %28 {offsets = [0, 31], sizes = [8, 1], strides = [1, 1]} : vector<8x32xf32> to vector<8x1xf32>
    %80 = vector.extract_strided_slice %28 {offsets = [0, 0], sizes = [8, 31], strides = [1, 1]} : vector<8x32xf32> to vector<8x31xf32>
    %81 = tpu.concatenate %79, %80 in 1 : vector<8x1xf32>, vector<8x31xf32> -> vector<8x32xf32>
    %82 = arith.select %75, %78, %81 : vector<8x32xi1>, vector<8x32xf32>
    %83 = arith.mulf %28, %55 : vector<8x32xf32>
    %84 = arith.mulf %82, %56 : vector<8x32xf32>
    %85 = arith.addf %83, %84 : vector<8x32xf32>
    %86 = tpu.iota {dimensions = array<i32: 1>} : vector<8x32xi32>
    %c2_i32_30 = arith.constant 2 : i32
    %c0_i32_31 = arith.constant 0 : i32
    %87 = arith.cmpi eq, %c2_i32_30, %c0_i32_31 : i32
    %c1_i32_32 = arith.constant 1 : i32
    %88 = arith.select %87, %c1_i32_32, %c2_i32_30 : i32
    %89 = vector.broadcast %88 : i32 to vector<8x32xi32>
    %90 = arith.remsi %86, %89 : vector<8x32xi32>
    %c0_i32_33 = arith.constant 0 : i32
    %91 = vector.broadcast %c0_i32_33 : i32 to vector<8x32xi32>
    %92 = arith.cmpi ne, %90, %91 : vector<8x32xi32>
    %c0_i32_34 = arith.constant 0 : i32
    %93 = vector.broadcast %c0_i32_34 : i32 to vector<8x32xi32>
    %94 = arith.cmpi slt, %90, %93 : vector<8x32xi32>
    %c0_i32_35 = arith.constant 0 : i32
    %95 = arith.cmpi slt, %88, %c0_i32_35 : i32
    %96 = vector.broadcast %95 : i1 to vector<8x32xi1>
    %97 = vector.broadcast %96 : vector<8x32xi1> to vector<8x32xi1>
    %98 = arith.xori %94, %97 : vector<8x32xi1>
    %99 = arith.andi %98, %92 : vector<8x32xi1>
    %100 = vector.broadcast %88 : i32 to vector<8x32xi32>
    %101 = arith.addi %90, %100 : vector<8x32xi32>
    %102 = arith.select %99, %101, %90 : vector<8x32xi1>, vector<8x32xi32>
    %c0_i32_36 = arith.constant 0 : i32
    %103 = vector.broadcast %c0_i32_36 : i32 to vector<8x32xi32>
    %104 = arith.cmpi eq, %102, %103 : vector<8x32xi32>
    %105 = vector.extract_strided_slice %53 {offsets = [0, 1], sizes = [8, 31], strides = [1, 1]} : vector<8x32xf32> to vector<8x31xf32>
    %106 = vector.extract_strided_slice %53 {offsets = [0, 0], sizes = [8, 1], strides = [1, 1]} : vector<8x32xf32> to vector<8x1xf32>
    %107 = tpu.concatenate %105, %106 in 1 : vector<8x31xf32>, vector<8x1xf32> -> vector<8x32xf32>
    %108 = vector.extract_strided_slice %53 {offsets = [0, 31], sizes = [8, 1], strides = [1, 1]} : vector<8x32xf32> to vector<8x1xf32>
    %109 = vector.extract_strided_slice %53 {offsets = [0, 0], sizes = [8, 31], strides = [1, 1]} : vector<8x32xf32> to vector<8x31xf32>
    %110 = tpu.concatenate %108, %109 in 1 : vector<8x1xf32>, vector<8x31xf32> -> vector<8x32xf32>
    %111 = arith.select %104, %107, %110 : vector<8x32xi1>, vector<8x32xf32>
    %112 = arith.mulf %53, %55 : vector<8x32xf32>
    %113 = arith.mulf %111, %56 : vector<8x32xf32>
    %114 = arith.addf %112, %113 : vector<8x32xf32>
    %cst_37 = arith.constant 0.353553385 : f32
    %115 = vector.broadcast %cst_37 : f32 to vector<8x32xf32>
    %116 = arith.mulf %85, %115 : vector<8x32xf32>
    %117 = vector.extract_strided_slice %116 {offsets = [0, 0], sizes = [8, 8], strides = [1, 1]} : vector<8x32xf32> to vector<8x8xf32>
    %118 = arith.truncf %117 : vector<8x8xf32> to vector<8x8xbf16>
    %c0_38 = arith.constant 0 : index
    %c0_39 = arith.constant 0 : index
    %c0_40 = arith.constant 0 : index
    %c0_41 = arith.constant 0 : index
    %119 = vector.load %arg10[%c0_38, %c0_39, %c0_40, %c0_41] : memref<1x4x8x8xbf16, #tpu.memory_space<vmem>>, vector<1x1x8x8xbf16>
    %120 = vector.shape_cast %119 : vector<1x1x8x8xbf16> to vector<8x8xbf16>
    %121 = vector.shape_cast %118 : vector<8x8xbf16> to vector<1x1x8x8xbf16>
    tpu.vector_store %arg10[%c0_38, %c0_39, %c0_40, %c0_41], %121 {strides = array<i32>} : memref<1x4x8x8xbf16, #tpu.memory_space<vmem>>, vector<1x1x8x8xbf16>,
    %122 = vector.extract_strided_slice %114 {offsets = [0, 0], sizes = [8, 8], strides = [1, 1]} : vector<8x32xf32> to vector<8x8xf32>
    %123 = arith.truncf %122 : vector<8x8xf32> to vector<8x8xbf16>
    %c0_42 = arith.constant 0 : index
    %c0_43 = arith.constant 0 : index
    %c0_44 = arith.constant 0 : index
    %c0_45 = arith.constant 0 : index
    %124 = vector.load %arg11[%c0_42, %c0_43, %c0_44, %c0_45] : memref<1x4x8x8xbf16, #tpu.memory_space<vmem>>, vector<1x1x8x8xbf16>
    %125 = vector.shape_cast %124 : vector<1x1x8x8xbf16> to vector<8x8xbf16>
    %126 = vector.shape_cast %123 : vector<8x8xbf16> to vector<1x1x8x8xbf16>
    tpu.vector_store %arg11[%c0_42, %c0_43, %c0_44, %c0_45], %126 {strides = array<i32>} : memref<1x4x8x8xbf16, #tpu.memory_space<vmem>>, vector<1x1x8x8xbf16>,
    %127 = vector.extract_strided_slice %54 {offsets = [0, 0], sizes = [8, 8], strides = [1, 1]} : vector<8x32xf32> to vector<8x8xf32>
    %128 = arith.truncf %127 : vector<8x8xf32> to vector<8x8xbf16>
    %c0_46 = arith.constant 0 : index
    %c0_47 = arith.constant 0 : index
    %c0_48 = arith.constant 0 : index
    %c0_49 = arith.constant 0 : index
    %129 = vector.load %arg12[%c0_46, %c0_47, %c0_48, %c0_49] : memref<1x4x8x8xbf16, #tpu.memory_space<vmem>>, vector<1x1x8x8xbf16>
    %130 = vector.shape_cast %129 : vector<1x1x8x8xbf16> to vector<8x8xbf16>
    %131 = vector.shape_cast %128 : vector<8x8xbf16> to vector<1x1x8x8xbf16>
    tpu.vector_store %arg12[%c0_46, %c0_47, %c0_48, %c0_49], %131 {strides = array<i32>} : memref<1x4x8x8xbf16, #tpu.memory_space<vmem>>, vector<1x1x8x8xbf16>,
    %132 = vector.extract_strided_slice %116 {offsets = [0, 8], sizes = [8, 8], strides = [1, 1]} : vector<8x32xf32> to vector<8x8xf32>
    %133 = arith.truncf %132 : vector<8x8xf32> to vector<8x8xbf16>
    %c0_50 = arith.constant 0 : index
    %c1 = arith.constant 1 : index
    %c0_51 = arith.constant 0 : index
    %c0_52 = arith.constant 0 : index
    %134 = vector.load %arg10[%c0_50, %c1, %c0_51, %c0_52] : memref<1x4x8x8xbf16, #tpu.memory_space<vmem>>, vector<1x1x8x8xbf16>
    %135 = vector.shape_cast %134 : vector<1x1x8x8xbf16> to vector<8x8xbf16>
    %136 = vector.shape_cast %133 : vector<8x8xbf16> to vector<1x1x8x8xbf16>
    tpu.vector_store %arg10[%c0_50, %c1, %c0_51, %c0_52], %136 {strides = array<i32>} : memref<1x4x8x8xbf16, #tpu.memory_space<vmem>>, vector<1x1x8x8xbf16>,
    %137 = vector.extract_strided_slice %114 {offsets = [0, 8], sizes = [8, 8], strides = [1, 1]} : vector<8x32xf32> to vector<8x8xf32>
    %138 = arith.truncf %137 : vector<8x8xf32> to vector<8x8xbf16>
    %c0_53 = arith.constant 0 : index
    %c1_54 = arith.constant 1 : index
    %c0_55 = arith.constant 0 : index
    %c0_56 = arith.constant 0 : index
    %139 = vector.load %arg11[%c0_53, %c1_54, %c0_55, %c0_56] : memref<1x4x8x8xbf16, #tpu.memory_space<vmem>>, vector<1x1x8x8xbf16>
    %140 = vector.shape_cast %139 : vector<1x1x8x8xbf16> to vector<8x8xbf16>
    %141 = vector.shape_cast %138 : vector<8x8xbf16> to vector<1x1x8x8xbf16>
    tpu.vector_store %arg11[%c0_53, %c1_54, %c0_55, %c0_56], %141 {strides = array<i32>} : memref<1x4x8x8xbf16, #tpu.memory_space<vmem>>, vector<1x1x8x8xbf16>,
    %142 = vector.extract_strided_slice %54 {offsets = [0, 8], sizes = [8, 8], strides = [1, 1]} : vector<8x32xf32> to vector<8x8xf32>
    %143 = arith.truncf %142 : vector<8x8xf32> to vector<8x8xbf16>
    %c0_57 = arith.constant 0 : index
    %c1_58 = arith.constant 1 : index
    %c0_59 = arith.constant 0 : index
    %c0_60 = arith.constant 0 : index
    %144 = vector.load %arg12[%c0_57, %c1_58, %c0_59, %c0_60] : memref<1x4x8x8xbf16, #tpu.memory_space<vmem>>, vector<1x1x8x8xbf16>
    %145 = vector.shape_cast %144 : vector<1x1x8x8xbf16> to vector<8x8xbf16>
    %146 = vector.shape_cast %143 : vector<8x8xbf16> to vector<1x1x8x8xbf16>
    tpu.vector_store %arg12[%c0_57, %c1_58, %c0_59, %c0_60], %146 {strides = array<i32>} : memref<1x4x8x8xbf16, #tpu.memory_space<vmem>>, vector<1x1x8x8xbf16>,
    %147 = vector.extract_strided_slice %116 {offsets = [0, 16], sizes = [8, 8], strides = [1, 1]} : vector<8x32xf32> to vector<8x8xf32>
    %148 = arith.truncf %147 : vector<8x8xf32> to vector<8x8xbf16>
    %c0_61 = arith.constant 0 : index
    %c2 = arith.constant 2 : index
    %c0_62 = arith.constant 0 : index
    %c0_63 = arith.constant 0 : index
    %149 = vector.load %arg10[%c0_61, %c2, %c0_62, %c0_63] : memref<1x4x8x8xbf16, #tpu.memory_space<vmem>>, vector<1x1x8x8xbf16>
    %150 = vector.shape_cast %149 : vector<1x1x8x8xbf16> to vector<8x8xbf16>
    %151 = vector.shape_cast %148 : vector<8x8xbf16> to vector<1x1x8x8xbf16>
    tpu.vector_store %arg10[%c0_61, %c2, %c0_62, %c0_63], %151 {strides = array<i32>} : memref<1x4x8x8xbf16, #tpu.memory_space<vmem>>, vector<1x1x8x8xbf16>,
    %152 = vector.extract_strided_slice %114 {offsets = [0, 16], sizes = [8, 8], strides = [1, 1]} : vector<8x32xf32> to vector<8x8xf32>
    %153 = arith.truncf %152 : vector<8x8xf32> to vector<8x8xbf16>
    %c0_64 = arith.constant 0 : index
    %c2_65 = arith.constant 2 : index
    %c0_66 = arith.constant 0 : index
    %c0_67 = arith.constant 0 : index
    %154 = vector.load %arg11[%c0_64, %c2_65, %c0_66, %c0_67] : memref<1x4x8x8xbf16, #tpu.memory_space<vmem>>, vector<1x1x8x8xbf16>
    %155 = vector.shape_cast %154 : vector<1x1x8x8xbf16> to vector<8x8xbf16>
    %156 = vector.shape_cast %153 : vector<8x8xbf16> to vector<1x1x8x8xbf16>
    tpu.vector_store %arg11[%c0_64, %c2_65, %c0_66, %c0_67], %156 {strides = array<i32>} : memref<1x4x8x8xbf16, #tpu.memory_space<vmem>>, vector<1x1x8x8xbf16>,
    %157 = vector.extract_strided_slice %54 {offsets = [0, 16], sizes = [8, 8], strides = [1, 1]} : vector<8x32xf32> to vector<8x8xf32>
    %158 = arith.truncf %157 : vector<8x8xf32> to vector<8x8xbf16>
    %c0_68 = arith.constant 0 : index
    %c2_69 = arith.constant 2 : index
    %c0_70 = arith.constant 0 : index
    %c0_71 = arith.constant 0 : index
    %159 = vector.load %arg12[%c0_68, %c2_69, %c0_70, %c0_71] : memref<1x4x8x8xbf16, #tpu.memory_space<vmem>>, vector<1x1x8x8xbf16>
    %160 = vector.shape_cast %159 : vector<1x1x8x8xbf16> to vector<8x8xbf16>
    %161 = vector.shape_cast %158 : vector<8x8xbf16> to vector<1x1x8x8xbf16>
    tpu.vector_store %arg12[%c0_68, %c2_69, %c0_70, %c0_71], %161 {strides = array<i32>} : memref<1x4x8x8xbf16, #tpu.memory_space<vmem>>, vector<1x1x8x8xbf16>,
    %162 = vector.extract_strided_slice %116 {offsets = [0, 24], sizes = [8, 8], strides = [1, 1]} : vector<8x32xf32> to vector<8x8xf32>
    %163 = arith.truncf %162 : vector<8x8xf32> to vector<8x8xbf16>
    %c0_72 = arith.constant 0 : index
    %c3 = arith.constant 3 : index
    %c0_73 = arith.constant 0 : index
    %c0_74 = arith.constant 0 : index
    %164 = vector.load %arg10[%c0_72, %c3, %c0_73, %c0_74] : memref<1x4x8x8xbf16, #tpu.memory_space<vmem>>, vector<1x1x8x8xbf16>
    %165 = vector.shape_cast %164 : vector<1x1x8x8xbf16> to vector<8x8xbf16>
    %166 = vector.shape_cast %163 : vector<8x8xbf16> to vector<1x1x8x8xbf16>
    tpu.vector_store %arg10[%c0_72, %c3, %c0_73, %c0_74], %166 {strides = array<i32>} : memref<1x4x8x8xbf16, #tpu.memory_space<vmem>>, vector<1x1x8x8xbf16>,
    %167 = vector.extract_strided_slice %114 {offsets = [0, 24], sizes = [8, 8], strides = [1, 1]} : vector<8x32xf32> to vector<8x8xf32>
    %168 = arith.truncf %167 : vector<8x8xf32> to vector<8x8xbf16>
    %c0_75 = arith.constant 0 : index
    %c3_76 = arith.constant 3 : index
    %c0_77 = arith.constant 0 : index
    %c0_78 = arith.constant 0 : index
    %169 = vector.load %arg11[%c0_75, %c3_76, %c0_77, %c0_78] : memref<1x4x8x8xbf16, #tpu.memory_space<vmem>>, vector<1x1x8x8xbf16>
    %170 = vector.shape_cast %169 : vector<1x1x8x8xbf16> to vector<8x8xbf16>
    %171 = vector.shape_cast %168 : vector<8x8xbf16> to vector<1x1x8x8xbf16>
    tpu.vector_store %arg11[%c0_75, %c3_76, %c0_77, %c0_78], %171 {strides = array<i32>} : memref<1x4x8x8xbf16, #tpu.memory_space<vmem>>, vector<1x1x8x8xbf16>,
    %172 = vector.extract_strided_slice %54 {offsets = [0, 24], sizes = [8, 8], strides = [1, 1]} : vector<8x32xf32> to vector<8x8xf32>
    %173 = arith.truncf %172 : vector<8x8xf32> to vector<8x8xbf16>
    %c0_79 = arith.constant 0 : index
    %c3_80 = arith.constant 3 : index
    %c0_81 = arith.constant 0 : index
    %c0_82 = arith.constant 0 : index
    %174 = vector.load %arg12[%c0_79, %c3_80, %c0_81, %c0_82] : memref<1x4x8x8xbf16, #tpu.memory_space<vmem>>, vector<1x1x8x8xbf16>
    %175 = vector.shape_cast %174 : vector<1x1x8x8xbf16> to vector<8x8xbf16>
    %176 = vector.shape_cast %173 : vector<8x8xbf16> to vector<1x1x8x8xbf16>
    tpu.vector_store %arg12[%c0_79, %c3_80, %c0_81, %c0_82], %176 {strides = array<i32>} : memref<1x4x8x8xbf16, #tpu.memory_space<vmem>>, vector<1x1x8x8xbf16>,
    return
  }
  func.func @transform_0(%arg0: i32, %arg1: i32) -> (i32, i32, i32) {
    %c0_i32 = arith.constant 0 : i32
    %c0_i32_0 = arith.constant 0 : i32
    return %arg0, %arg1, %c0_i32 : i32, i32, i32
  }
  func.func @transform_1(%arg0: i32, %arg1: i32) -> (i32, i32) {
    %c0_i32 = arith.constant 0 : i32
    %c0_i32_0 = arith.constant 0 : i32
    %c0_i32_1 = arith.constant 0 : i32
    return %c0_i32, %c0_i32_0 : i32, i32
  }
  func.func @transform_2(%arg0: i32, %arg1: i32) -> (i32, i32) {
    %c0_i32 = arith.constant 0 : i32
    %c0_i32_0 = arith.constant 0 : i32
    %c0_i32_1 = arith.constant 0 : i32
    return %c0_i32, %c0_i32_0 : i32, i32
  }
  func.func @transform_3(%arg0: i32, %arg1: i32) -> (i32, i32) {
    %c0_i32 = arith.constant 0 : i32
    %c0_i32_0 = arith.constant 0 : i32
    %c0_i32_1 = arith.constant 0 : i32
    return %c0_i32, %c0_i32_0 : i32, i32
  }
  func.func @transform_4(%arg0: i32, %arg1: i32) -> (i32, i32) {
    %c0_i32 = arith.constant 0 : i32
    %c0_i32_0 = arith.constant 0 : i32
    %c0_i32_1 = arith.constant 0 : i32
    return %c0_i32, %c0_i32_0 : i32, i32
  }
  func.func @transform_5(%arg0: i32, %arg1: i32) -> (i32, i32) {
    %c0_i32 = arith.constant 0 : i32
    %c0_i32_0 = arith.constant 0 : i32
    %c0_i32_1 = arith.constant 0 : i32
    return %c0_i32, %c0_i32_0 : i32, i32
  }
  func.func @transform_6(%arg0: i32, %arg1: i32) -> (i32, i32) {
    %c0_i32 = arith.constant 0 : i32
    %c0_i32_0 = arith.constant 0 : i32
    return %arg1, %c0_i32 : i32, i32
  }
  func.func @transform_7(%arg0: i32, %arg1: i32) -> (i32, i32) {
    %c0_i32 = arith.constant 0 : i32
    %c0_i32_0 = arith.constant 0 : i32
    return %arg1, %c0_i32 : i32, i32
  }
  func.func @transform_8(%arg0: i32, %arg1: i32) -> (i32, i32, i32, i32) {
    %c0_i32 = arith.constant 0 : i32
    %c0_i32_0 = arith.constant 0 : i32
    %c0_i32_1 = arith.constant 0 : i32
    return %arg0, %c0_i32, %arg1, %c0_i32_0 : i32, i32, i32, i32
  }
  func.func @transform_9(%arg0: i32, %arg1: i32) -> (i32, i32, i32, i32) {
    %c0_i32 = arith.constant 0 : i32
    %c0_i32_0 = arith.constant 0 : i32
    %c0_i32_1 = arith.constant 0 : i32
    return %arg0, %c0_i32, %arg1, %c0_i32_0 : i32, i32, i32, i32
  }
  func.func @transform_10(%arg0: i32, %arg1: i32) -> (i32, i32, i32, i32) {
    %c0_i32 = arith.constant 0 : i32
    %c0_i32_0 = arith.constant 0 : i32
    %c0_i32_1 = arith.constant 0 : i32
    return %arg0, %c0_i32, %arg1, %c0_i32_0 : i32, i32, i32, i32
  }
}

</mosaic_0001>

<llo_original>
// kernel: tpu_custom_call.1
$region0: #{tpu_custom_call.1}
  #allocation0 [shape = 'u32[]', space=smem, size = 0x4, offset = 0x4, fixed_abs, tag = 'smem constant byte address 0x4 - core index']
  #allocation1 [shape = 'u32[144,128]{1,0:T(1,128)}', space=vmem, size = 0x12000, scoped, tag = 'internal scratch']
  %s0 = inlined_call_operand.hbm [shape: bf16[2,8,32], index: 0, kind: input, shape index: {}]
  %s1 = inlined_call_operand.hbm [shape: bf16[32,96], index: 1, kind: input, shape index: {}]
  %s2 = inlined_call_operand.vmem [shape: f32[1,32], index: 2, kind: input, shape index: {}]
  %s3 = inlined_call_operand.vmem [shape: f32[1,32], index: 3, kind: input, shape index: {}]
  %s4 = inlined_call_operand.hbm [shape: f32[1,32], index: 4, kind: input, shape index: {}]
  %s5 = inlined_call_operand.hbm [shape: f32[1,32], index: 5, kind: input, shape index: {}]
  %s6 = inlined_call_operand.vmem [shape: f32[8,32], index: 6, kind: input, shape index: {}]
  %s7 = inlined_call_operand.vmem [shape: f32[8,32], index: 7, kind: input, shape index: {}]
  %s8 = inlined_call_operand.hbm [shape: bf16[2,4,8,8], index: 8, kind: output, shape index: {0}]
  %s9 = inlined_call_operand.hbm [shape: bf16[2,4,8,8], index: 9, kind: output, shape index: {1}]
  %s10 = inlined_call_operand.hbm [shape: bf16[2,4,8,8], index: 10, kind: output, shape index: {2}]
  %11 = xla_tuple %s8, %s9, %s10
  %s12 = sld [smem:[#allocation0]]
  $region97: #{tpu_custom_call.1} parent=0
    _
  %s14 = ssub.s32 1, %s12
  %s15 = scalar_select 0, %s14, %s12
  $region1: #{tpu_custom_call.1} parent=0
    #allocation2 [shape = 'u8[4096]{0}', space=vmem, size = 0x1000, scoped, tag = 'input window, operand 0']
    #allocation3 [shape = 's32[2]{0}', space=sflag, size = 0x8, scoped, tag = 'scoped memory for tpu_custom_call.1']
    #allocation4 [shape = 's32[2]{0}', space=sflag, size = 0x8, scoped, tag = 'scoped memory for tpu_custom_call.1']
    #allocation5 [shape = 'u8[8192]{0}', space=vmem, size = 0x2000, scoped, tag = 'input window, operand 1, single buffered']
    #allocation6 [shape = 's32[1]{0}', space=sflag, size = 0x4, scoped, tag = 'scoped memory for tpu_custom_call.1']
    #allocation7 [shape = 'u8[512]{0}', space=vmem, size = 0x400, scoped, tag = 'input window, operand 4, single buffered']
    #allocation8 [shape = 'u8[512]{0}', space=vmem, size = 0x400, scoped, tag = 'input window, operand 5, single buffered']
    #allocation9 [shape = 's32[1]{0}', space=sflag, size = 0x4, scoped, tag = 'scoped memory for tpu_custom_call.1']
    #allocation10 [shape = 'u8[16384]{0}', space=vmem, size = 0x4000, scoped, tag = 'output window, operand 0']
    #allocation11 [shape = 'u8[16384]{0}', space=vmem, size = 0x4000, scoped, tag = 'output window, operand 1']
    #allocation12 [shape = 's32[2]{0}', space=sflag, size = 0x8, scoped, tag = 'scoped memory for tpu_custom_call.1']
    #allocation13 [shape = 'u8[16384]{0}', space=vmem, size = 0x4000, scoped, tag = 'output window, operand 2']
    %16 = vsyncpa [#allocation3], 0
    %s17 = scalar_lea.sflag [#allocation3], 1
    %18 = vsyncpa %s17, 0
    %19 = vsyncpa [#allocation6], 0
    %20 = vsyncpa [#allocation9], 0
    %21 = vsyncpa [#allocation4], 0
    %s22 = scalar_lea.sflag [#allocation4], 1
    %23 = vsyncpa %s22, 0
    %24 = vsyncpa [#allocation12], 0
    %s25 = scalar_lea.sflag [#allocation12], 1
    %26 = vsyncpa %s25, 0
    loop: start=0, step=1, limit=4
    $region2: #{tpu_custom_call.1} parent=1 // loop_pre_header
      _
    $region3: #{tpu_custom_call.1} parent=1 // loop_header
      %s28 = sphi 0, %s32
      %p29 = scmp.ge.s32.totalorder %s28, 4
      %s35 = sphi 0, %s47
      %s36 = sphi 0, %s43
      %s37 = sphi 0, %s35
      %s38 = sphi 0, %s36
      %s39 = sphi 0, %s37
      %s40 = sphi 0, %s38
      %s52 = sphi 0, %s54
      %s55 = sphi 0, %s52
      %s56 = sphi 0, %s55
      %s72 = sphi 0, %s56
      %s76 = sphi 0, %s76
      %s78 = sphi 0, %s76
      %s79 = sphi 0, %s78
      %s93 = sphi 0, %s79
      %s97 = sphi 0, %s97
      %s99 = sphi 0, %s97
      %s100 = sphi 0, %s99
      %s114 = sphi 0, %s100
      %s118 = sphi 0, %s118
      %s120 = sphi 0, %s118
      %s121 = sphi 0, %s120
      %s135 = sphi 0, %s121
      %s139 = sphi 0, %s139
      %s141 = sphi 0, %s139
      %s142 = sphi 0, %s141
      %s156 = sphi 0, %s142
      %s160 = sphi 0, %s160
      %s162 = sphi 0, %s160
      %s163 = sphi 0, %s162
      %s177 = sphi 0, %s163
      %s183 = sphi 0, %s185
      %s186 = sphi 0, %s183
      %s187 = sphi 0, %s186
      %s203 = sphi 0, %s187
      %s209 = sphi 0, %s211
      %s212 = sphi 0, %s209
      %s213 = sphi 0, %s212
      %s229 = sphi 0, %s213
      %s237 = sphi 0, %s239
      %s240 = sphi 0, %s237
      %s241 = sphi 0, %s240
      %s257 = sphi 0, %s241
      %s265 = sphi 0, %s267
      %s268 = sphi 0, %s265
      %s269 = sphi 0, %s268
      %s285 = sphi 0, %s269
      %s293 = sphi 0, %s295
      %s296 = sphi 0, %s293
      %s297 = sphi 0, %s296
      %s313 = sphi 0, %s297
    $region4: #{tpu_custom_call.1} parent=1 // loop_header_branch
      %31 = sbr.rel (%p29) target = $region8
    $region5: #{tpu_custom_call.1} parent=1 // loop_body
      %s33 = ssub.s32 %s28, 1
      %s34 = ssub.s32 %s28, 2
      %s41 = sadd.s32 1, %s36
      %p42 = scmp.ge.s32.totalorder %s41, 1
      %s43 = scalar_select %p42, 0, %s41
      %s44 = sadd.s32 1, %s35
      %s45 = scalar_select %p42, %s44, %s35
      %p46 = scmp.ge.s32.totalorder %s45, 2
      %s47 = scalar_select %p46, 0, %s45
      %s48 = ssub.s32 %s35, %s47
      %s49 = ssub.s32 %s36, %s43
      %s50 = sor.u32 %s48, %s49
      %p51 = scmp.eq.s32.totalorder %s50, 0
      %s53 = sadd.s32 %s52, 1
      %s54 = scalar_select %p51, %s52, %s53
      %p57 = pneg %p51
      %p58 = scmp.eq.s32.totalorder %s28, 1
      %p59 = por %p57, %p58
      %p60 = scmp.ne.s32.totalorder %s52, %s55
      %p61 = scmp.eq.s32.totalorder %s28, 0
      %p62 = por %p60, %p61
      %p63 = scmp.ne.s32.totalorder %s52, %s55
      %p64 = scmp.eq.s32.totalorder %s33, 1
      %p65 = por %p63, %p64
      %p66 = scmp.ne.s32.totalorder %s55, %s56
      %p67 = scmp.eq.s32.totalorder %s33, 0
      %p68 = por %p66, %p67
      %p69 = scmp.ne.s32.totalorder %s55, %s56
      %p70 = scmp.eq.s32.totalorder %s34, 1
      %p71 = por %p69, %p70
      %p73 = scmp.ne.s32.totalorder %s56, %s72
      %p74 = scmp.eq.s32.totalorder %s34, 0
      %p75 = por %p73, %p74
      %s77 = sadd.s32 %s76, 1
      %p80 = scmp.eq.s32.totalorder %s28, 1
      %p81 = scmp.ne.s32.totalorder %s76, %s78
      %p82 = scmp.eq.s32.totalorder %s28, 0
      %p83 = por %p81, %p82
      %p84 = scmp.ne.s32.totalorder %s76, %s78
      %p85 = scmp.eq.s32.totalorder %s33, 1
      %p86 = por %p84, %p85
      %p87 = scmp.ne.s32.totalorder %s78, %s79
      %p88 = scmp.eq.s32.totalorder %s33, 0
      %p89 = por %p87, %p88
      %p90 = scmp.ne.s32.totalorder %s78, %s79
      %p91 = scmp.eq.s32.totalorder %s34, 1
      %p92 = por %p90, %p91
      %p94 = scmp.ne.s32.totalorder %s79, %s93
      %p95 = scmp.eq.s32.totalorder %s34, 0
      %p96 = por %p94, %p95
      %s98 = sadd.s32 %s97, 1
      %p101 = scmp.eq.s32.totalorder %s28, 1
      %p102 = scmp.ne.s32.totalorder %s97, %s99
      %p103 = scmp.eq.s32.totalorder %s28, 0
      %p104 = por %p102, %p103
      %p105 = scmp.ne.s32.totalorder %s97, %s99
      %p106 = scmp.eq.s32.totalorder %s33, 1
      %p107 = por %p105, %p106
      %p108 = scmp.ne.s32.totalorder %s99, %s100
      %p109 = scmp.eq.s32.totalorder %s33, 0
      %p110 = por %p108, %p109
      %p111 = scmp.ne.s32.totalorder %s99, %s100
      %p112 = scmp.eq.s32.totalorder %s34, 1
      %p113 = por %p111, %p112
      %p115 = scmp.ne.s32.totalorder %s100, %s114
      %p116 = scmp.eq.s32.totalorder %s34, 0
      %p117 = por %p115, %p116
      %s119 = sadd.s32 %s118, 1
      %p122 = scmp.eq.s32.totalorder %s28, 1
      %p123 = scmp.ne.s32.totalorder %s118, %s120
      %p124 = scmp.eq.s32.totalorder %s28, 0
      %p125 = por %p123, %p124
      %p126 = scmp.ne.s32.totalorder %s118, %s120
      %p127 = scmp.eq.s32.totalorder %s33, 1
      %p128 = por %p126, %p127
      %p129 = scmp.ne.s32.totalorder %s120, %s121
      %p130 = scmp.eq.s32.totalorder %s33, 0
      %p131 = por %p129, %p130
      %p132 = scmp.ne.s32.totalorder %s120, %s121
      %p133 = scmp.eq.s32.totalorder %s34, 1
      %p134 = por %p132, %p133
      %p136 = scmp.ne.s32.totalorder %s121, %s135
      %p137 = scmp.eq.s32.totalorder %s34, 0
      %p138 = por %p136, %p137
      %s140 = sadd.s32 %s139, 1
      %p143 = scmp.eq.s32.totalorder %s28, 1
      %p144 = scmp.ne.s32.totalorder %s139, %s141
      %p145 = scmp.eq.s32.totalorder %s28, 0
      %p146 = por %p144, %p145
      %p147 = scmp.ne.s32.totalorder %s139, %s141
      %p148 = scmp.eq.s32.totalorder %s33, 1
      %p149 = por %p147, %p148
      %p150 = scmp.ne.s32.totalorder %s141, %s142
      %p151 = scmp.eq.s32.totalorder %s33, 0
      %p152 = por %p150, %p151
      %p153 = scmp.ne.s32.totalorder %s141, %s142
      %p154 = scmp.eq.s32.totalorder %s34, 1
      %p155 = por %p153, %p154
      %p157 = scmp.ne.s32.totalorder %s142, %s156
      %p158 = scmp.eq.s32.totalorder %s34, 0
      %p159 = por %p157, %p158
      %s161 = sadd.s32 %s160, 1
      %p164 = scmp.eq.s32.totalorder %s28, 1
      %p165 = scmp.ne.s32.totalorder %s160, %s162
      %p166 = scmp.eq.s32.totalorder %s28, 0
      %p167 = por %p165, %p166
      %p168 = scmp.ne.s32.totalorder %s160, %s162
      %p169 = scmp.eq.s32.totalorder %s33, 1
      %p170 = por %p168, %p169
      %p171 = scmp.ne.s32.totalorder %s162, %s163
      %p172 = scmp.eq.s32.totalorder %s33, 0
      %p173 = por %p171, %p172
      %p174 = scmp.ne.s32.totalorder %s162, %s163
      %p175 = scmp.eq.s32.totalorder %s34, 1
      %p176 = por %p174, %p175
      %p178 = scmp.ne.s32.totalorder %s163, %s177
      %p179 = scmp.eq.s32.totalorder %s34, 0
      %p180 = por %p178, %p179
      %s181 = ssub.s32 %s36, %s43
      %p182 = scmp.eq.s32.totalorder %s181, 0
      %s184 = sadd.s32 %s183, 1
      %s185 = scalar_select %p182, %s183, %s184
      %p188 = pneg %p182
      %p189 = scmp.eq.s32.totalorder %s28, 1
      %p190 = por %p188, %p189
      %p191 = scmp.ne.s32.totalorder %s183, %s186
      %p192 = scmp.eq.s32.totalorder %s28, 0
      %p193 = por %p191, %p192
      %p194 = scmp.ne.s32.totalorder %s183, %s186
      %p195 = scmp.eq.s32.totalorder %s33, 1
      %p196 = por %p194, %p195
      %p197 = scmp.ne.s32.totalorder %s186, %s187
      %p198 = scmp.eq.s32.totalorder %s33, 0
      %p199 = por %p197, %p198
      %p200 = scmp.ne.s32.totalorder %s186, %s187
      %p201 = scmp.eq.s32.totalorder %s34, 1
      %p202 = por %p200, %p201
      %p204 = scmp.ne.s32.totalorder %s187, %s203
      %p205 = scmp.eq.s32.totalorder %s34, 0
      %p206 = por %p204, %p205
      %s207 = ssub.s32 %s36, %s43
      %p208 = scmp.eq.s32.totalorder %s207, 0
      %s210 = sadd.s32 %s209, 1
      %s211 = scalar_select %p208, %s209, %s210
      %p214 = pneg %p208
      %p215 = scmp.eq.s32.totalorder %s28, 1
      %p216 = por %p214, %p215
      %p217 = scmp.ne.s32.totalorder %s209, %s212
      %p218 = scmp.eq.s32.totalorder %s28, 0
      %p219 = por %p217, %p218
      %p220 = scmp.ne.s32.totalorder %s209, %s212
      %p221 = scmp.eq.s32.totalorder %s33, 1
      %p222 = por %p220, %p221
      %p223 = scmp.ne.s32.totalorder %s212, %s213
      %p224 = scmp.eq.s32.totalorder %s33, 0
      %p225 = por %p223, %p224
      %p226 = scmp.ne.s32.totalorder %s212, %s213
      %p227 = scmp.eq.s32.totalorder %s34, 1
      %p228 = por %p226, %p227
      %p230 = scmp.ne.s32.totalorder %s213, %s229
      %p231 = scmp.eq.s32.totalorder %s34, 0
      %p232 = por %p230, %p231
      %s233 = ssub.s32 %s35, %s47
      %s234 = ssub.s32 %s36, %s43
      %s235 = sor.u32 %s233, %s234
      %p236 = scmp.eq.s32.totalorder %s235, 0
      %s238 = sadd.s32 %s237, 1
      %s239 = scalar_select %p236, %s237, %s238
      %p242 = pneg %p236
      %p243 = scmp.eq.s32.totalorder %s28, 1
      %p244 = por %p242, %p243
      %p245 = scmp.ne.s32.totalorder %s237, %s240
      %p246 = scmp.eq.s32.totalorder %s28, 0
      %p247 = por %p245, %p246
      %p248 = scmp.ne.s32.totalorder %s237, %s240
      %p249 = scmp.eq.s32.totalorder %s33, 1
      %p250 = por %p248, %p249
      %p251 = scmp.ne.s32.totalorder %s240, %s241
      %p252 = scmp.eq.s32.totalorder %s33, 0
      %p253 = por %p251, %p252
      %p254 = scmp.ne.s32.totalorder %s240, %s241
      %p255 = scmp.eq.s32.totalorder %s34, 1
      %p256 = por %p254, %p255
      %p258 = scmp.ne.s32.totalorder %s241, %s257
      %p259 = scmp.eq.s32.totalorder %s34, 0
      %p260 = por %p258, %p259
      %s261 = ssub.s32 %s35, %s47
      %s262 = ssub.s32 %s36, %s43
      %s263 = sor.u32 %s261, %s262
      %p264 = scmp.eq.s32.totalorder %s263, 0
      %s266 = sadd.s32 %s265, 1
      %s267 = scalar_select %p264, %s265, %s266
      %p270 = pneg %p264
      %p271 = scmp.eq.s32.totalorder %s28, 1
      %p272 = por %p270, %p271
      %p273 = scmp.ne.s32.totalorder %s265, %s268
      %p274 = scmp.eq.s32.totalorder %s28, 0
      %p275 = por %p273, %p274
      %p276 = scmp.ne.s32.totalorder %s265, %s268
      %p277 = scmp.eq.s32.totalorder %s33, 1
      %p278 = por %p276, %p277
      %p279 = scmp.ne.s32.totalorder %s268, %s269
      %p280 = scmp.eq.s32.totalorder %s33, 0
      %p281 = por %p279, %p280
      %p282 = scmp.ne.s32.totalorder %s268, %s269
      %p283 = scmp.eq.s32.totalorder %s34, 1
      %p284 = por %p282, %p283
      %p286 = scmp.ne.s32.totalorder %s269, %s285
      %p287 = scmp.eq.s32.totalorder %s34, 0
      %p288 = por %p286, %p287
      %s289 = ssub.s32 %s35, %s47
      %s290 = ssub.s32 %s36, %s43
      %s291 = sor.u32 %s289, %s290
      %p292 = scmp.eq.s32.totalorder %s291, 0
      %s294 = sadd.s32 %s293, 1
      %s295 = scalar_select %p292, %s293, %s294
      %p298 = pneg %p292
      %p299 = scmp.eq.s32.totalorder %s28, 1
      %p300 = por %p298, %p299
      %p301 = scmp.ne.s32.totalorder %s293, %s296
      %p302 = scmp.eq.s32.totalorder %s28, 0
      %p303 = por %p301, %p302
      %p304 = scmp.ne.s32.totalorder %s293, %s296
      %p305 = scmp.eq.s32.totalorder %s33, 1
      %p306 = por %p304, %p305
      %p307 = scmp.ne.s32.totalorder %s296, %s297
      %p308 = scmp.eq.s32.totalorder %s33, 0
      %p309 = por %p307, %p308
      %p310 = scmp.ne.s32.totalorder %s296, %s297
      %p311 = scmp.eq.s32.totalorder %s34, 1
      %p312 = por %p310, %p311
      %p314 = scmp.ne.s32.totalorder %s297, %s313
      %p315 = scmp.eq.s32.totalorder %s34, 0
      %p316 = por %p314, %p315
      %p317 = scmp.le.s32.totalorder 1, %s28
      %p318 = scmp.lt.s32.totalorder %s28, 3
      %p319 = pnand %p317, %p318
      %p320 = pneg %p319
      // Predicated region
      $region9: #{tpu_custom_call.1} parent=5 // pred_check
        _
      $region10: #{tpu_custom_call.1} parent=5 // pred_check_branch
        %322 = sbr.rel (%p319) target = $region12
      $region11: #{tpu_custom_call.1} parent=5 // pred_region
        %s323 = ssub.s32 %s28, 1
        // Predicated region
        $region13: #{tpu_custom_call.1} parent=11 // pred_check
          %p324 = pneg %p89
        $region14: #{tpu_custom_call.1} parent=11 // pred_check_branch
          %326 = sbr.rel (%p324) target = $region16
        $region15: #{tpu_custom_call.1} parent=11 // pred_region
          %s328 = ssub.s32 256, 256
          %329 = vsyncadd [#allocation6], %s328
          %s330 = sshll.u32 [#allocation5], 4
          %s331 = int_to_ptr.vmem [resolvable:$true] %s330
          %336 = dma.hbm_to_vmem [thread:$0]  %s1, 256, %s331, [#allocation6], 64, 64, 4
        $region16: #{tpu_custom_call.1} parent=11 // pred_fallthru
          _
        // Predicated region
        $region17: #{tpu_custom_call.1} parent=11 // pred_check
          %p337 = pneg %p110
        $region18: #{tpu_custom_call.1} parent=11 // pred_check_branch
          %339 = sbr.rel (%p337) target = $region20
        $region19: #{tpu_custom_call.1} parent=11 // pred_region
          _
        $region20: #{tpu_custom_call.1} parent=11 // pred_fallthru
          _
        // Predicated region
        $region21: #{tpu_custom_call.1} parent=11 // pred_check
          %p340 = pneg %p131
        $region22: #{tpu_custom_call.1} parent=11 // pred_check_branch
          %342 = sbr.rel (%p340) target = $region24
        $region23: #{tpu_custom_call.1} parent=11 // pred_region
          _
        $region24: #{tpu_custom_call.1} parent=11 // pred_fallthru
          _
        // Predicated region
        $region25: #{tpu_custom_call.1} parent=11 // pred_check
          %p343 = pneg %p152
        $region26: #{tpu_custom_call.1} parent=11 // pred_check_branch
          %345 = sbr.rel (%p343) target = $region28
        $region27: #{tpu_custom_call.1} parent=11 // pred_region
          %s347 = ssub.s32 16, 16
          %348 = vsyncadd [#allocation6], %s347
          %s350 = sshll.u32 [#allocation7], 4
          %s351 = int_to_ptr.vmem [resolvable:$true] %s350
          %353 = dma.hbm_to_vmem [thread:$0]  %s4, 16, %s351, [#allocation6]
        $region28: #{tpu_custom_call.1} parent=11 // pred_fallthru
          _
        // Predicated region
        $region29: #{tpu_custom_call.1} parent=11 // pred_check
          %p354 = pneg %p173
        $region30: #{tpu_custom_call.1} parent=11 // pred_check_branch
          %356 = sbr.rel (%p354) target = $region32
        $region31: #{tpu_custom_call.1} parent=11 // pred_region
          %s358 = ssub.s32 16, 16
          %359 = vsyncadd [#allocation9], %s358
          %s361 = sshll.u32 [#allocation8], 4
          %s362 = int_to_ptr.vmem [resolvable:$true] %s361
          %364 = dma.hbm_to_vmem [thread:$0]  %s5, 16, %s362, [#allocation9]
        $region32: #{tpu_custom_call.1} parent=11 // pred_fallthru
          _
        // Predicated region
        $region33: #{tpu_custom_call.1} parent=11 // pred_check
          %p365 = pneg %p199
        $region34: #{tpu_custom_call.1} parent=11 // pred_check_branch
          %367 = sbr.rel (%p365) target = $region36
        $region35: #{tpu_custom_call.1} parent=11 // pred_region
          %p368 = scmp.lt.s32.totalorder %s38, 0
          %s369 = scalar_select %p368, %s38, 0
          %s370 = smul.addr %s369, 8
          %s371 = scalar_lea.vmem %s6, %s370
        $region36: #{tpu_custom_call.1} parent=11 // pred_fallthru
          _
        // Predicated region
        $region37: #{tpu_custom_call.1} parent=11 // pred_check
          %p372 = pneg %p225
        $region38: #{tpu_custom_call.1} parent=11 // pred_check_branch
          %374 = sbr.rel (%p372) target = $region40
        $region39: #{tpu_custom_call.1} parent=11 // pred_region
          %p375 = scmp.lt.s32.totalorder %s38, 0
          %s376 = scalar_select %p375, %s38, 0
          %s377 = smul.addr %s376, 8
          %s378 = scalar_lea.vmem %s7, %s377
        $region40: #{tpu_custom_call.1} parent=11 // pred_fallthru
          _
      $region12: #{tpu_custom_call.1} parent=5 // pred_fallthru
        _
      %p379 = scmp.lt.s32.totalorder %s28, 2
      // Predicated region
      $region41: #{tpu_custom_call.1} parent=5 // pred_check
        %p380 = pneg %p379
      $region42: #{tpu_custom_call.1} parent=5 // pred_check_branch
        %382 = sbr.rel (%p380) target = $region44
      $region43: #{tpu_custom_call.1} parent=5 // pred_region
        // Predicated region
        $region45: #{tpu_custom_call.1} parent=43 // pred_check
          %p383 = pneg %p62
        $region46: #{tpu_custom_call.1} parent=43 // pred_check_branch
          %385 = sbr.rel (%p383) target = $region48
        $region47: #{tpu_custom_call.1} parent=43 // pred_region
          %s386 = sand.u32 %s52, 1
          %s387 = scalar_lea.sflag [#allocation3], %s386
          %s388 = sand.u32 %s52, 1
          %s389 = smul.addr %s388, 4
          %s390 = scalar_lea.vmem [#allocation2], %s389
          %s392 = ssub.s32 64, 64
          %393 = vsyncadd %s387, %s392
          %s394 = sadd.s32 %s36, %s35
          %s395 = smul.addr %s394, 64
          %s396 = scalar_lea.hbm %s0, %s395
          %s398 = sshll.u32 %s390, 4
          %s399 = int_to_ptr.vmem [resolvable:$true] %s398
          %401 = dma.hbm_to_vmem [thread:$0]  %s396, 64, %s399, %s387
        $region48: #{tpu_custom_call.1} parent=43 // pred_fallthru
          _
      $region44: #{tpu_custom_call.1} parent=5 // pred_fallthru
        _
      %p402 = scmp.le.s32.totalorder 1, %s28
      %p403 = scmp.lt.s32.totalorder %s28, 3
      %p404 = pnand %p402, %p403
      %p405 = pneg %p404
      // Predicated region
      $region49: #{tpu_custom_call.1} parent=5 // pred_check
        _
      $region50: #{tpu_custom_call.1} parent=5 // pred_check_branch
        %407 = sbr.rel (%p404) target = $region52
      $region51: #{tpu_custom_call.1} parent=5 // pred_region
        %s408 = ssub.s32 %s28, 1
        %s409 = sand.u32 %s55, 1
        %s410 = scalar_lea.sflag [#allocation3], %s409
        %s411 = sand.u32 %s55, 1
        %s412 = smul.addr %s411, 4
        %s413 = scalar_lea.vmem [#allocation2], %s412
        // Predicated region
        $region53: #{tpu_custom_call.1} parent=51 // pred_check
          %p414 = pneg %p68
        $region54: #{tpu_custom_call.1} parent=51 // pred_check_branch
          %416 = sbr.rel (%p414) target = $region56
        $region55: #{tpu_custom_call.1} parent=51 // pred_region
          %417 = dma.done %s410, 64
        $region56: #{tpu_custom_call.1} parent=51 // pred_fallthru
          _
        // Predicated region
        $region57: #{tpu_custom_call.1} parent=51 // pred_check
          %p418 = pneg %p89
        $region58: #{tpu_custom_call.1} parent=51 // pred_check_branch
          %420 = sbr.rel (%p418) target = $region60
        $region59: #{tpu_custom_call.1} parent=51 // pred_region
          %421 = dma.done [#allocation6], 256
        $region60: #{tpu_custom_call.1} parent=51 // pred_fallthru
          _
        // Predicated region
        $region61: #{tpu_custom_call.1} parent=51 // pred_check
          %p422 = pneg %p152
        $region62: #{tpu_custom_call.1} parent=51 // pred_check_branch
          %424 = sbr.rel (%p422) target = $region64
        $region63: #{tpu_custom_call.1} parent=51 // pred_region
          %425 = dma.done [#allocation6], 16
        $region64: #{tpu_custom_call.1} parent=51 // pred_fallthru
          _
        // Predicated region
        $region65: #{tpu_custom_call.1} parent=51 // pred_check
          %p426 = pneg %p173
        $region66: #{tpu_custom_call.1} parent=51 // pred_check_branch
          %428 = sbr.rel (%p426) target = $region68
        $region67: #{tpu_custom_call.1} parent=51 // pred_region
          %429 = dma.done [#allocation9], 16
        $region68: #{tpu_custom_call.1} parent=51 // pred_fallthru
          _
        %s430 = sand.u32 %s55, 1
        %s431 = scalar_lea.sflag [#allocation3], %s430
        %s432 = sand.u32 %s55, 1
        %s433 = smul.addr %s432, 4
        %s434 = scalar_lea.vmem [#allocation2], %s433
        %p435 = pneg %p68
        %p436 = pneg %p65
        %p437 = pneg %p89
        %p438 = pneg %p86
        %p439 = pneg %p110
        %p440 = pneg %p107
        %p441 = pneg %p131
        %p442 = pneg %p128
        %p443 = pneg %p152
        %p444 = pneg %p149
        %p445 = pneg %p173
        %p446 = pneg %p170
        %p447 = scmp.lt.s32.totalorder %s38, 0
        %s448 = scalar_select %p447, %s38, 0
        %s449 = smul.addr %s448, 8
        %s450 = scalar_lea.vmem %s6, %s449
        %p451 = pneg %p199
        %p452 = pneg %p196
        %p453 = scmp.lt.s32.totalorder %s38, 0
        %s454 = scalar_select %p453, %s38, 0
        %s455 = smul.addr %s454, 8
        %s456 = scalar_lea.vmem %s7, %s455
        %p457 = pneg %p225
        %p458 = pneg %p222
        %p459 = pneg %p253
        %p460 = pneg %p250
        %s461 = sand.u32 %s240, 1
        %s462 = scalar_lea.sflag [#allocation4], %s461
        %s463 = sand.u32 %s240, 1
        %s464 = smul.addr %s463, 16
        %s465 = scalar_lea.vmem [#allocation10], %s464
        %p466 = pneg %p281
        %p467 = pneg %p278
        %s468 = sand.u32 %s33, 1
        %s469 = scalar_lea.sflag [#allocation12], %s468
        %s470 = sand.u32 %s268, 1
        %s471 = smul.addr %s470, 16
        %s472 = scalar_lea.vmem [#allocation11], %s471
        %p473 = pneg %p309
        %p474 = pneg %p306
        %s475 = sand.u32 %s33, 1
        %s476 = scalar_lea.sflag [#allocation12], %s475
        %s477 = sand.u32 %s296, 1
        %s478 = smul.addr %s477, 16
        %s479 = scalar_lea.vmem [#allocation13], %s478
        %p480 = scmp.lt.s32.totalorder %s38, 0
        %s481 = scalar_select %p480, %s38, 0
        %s482 = smul.addr %s481, 8
        %s483 = scalar_lea.vmem %s6, %s482
        %p484 = scmp.lt.s32.totalorder %s38, 0
        %s485 = scalar_select %p484, %s38, 0
        %s486 = smul.addr %s485, 8
        %s487 = scalar_lea.vmem %s7, %s486
        %v489 = vld [vmem:[%s413] sm:$0xf]
        %v490 = vld [vmem:[#allocation5] sm:$0xf]
        %v491 = vld [vmem:[#allocation5 + $0x4] sm:$0xf]
        %v492 = vld [vmem:[#allocation5 + $0x8] sm:$0xf]
        %v493 = vld [vmem:[#allocation5 + $0xc] sm:$0xf]
        %v498 = vunpack.c.l.b16 %v490
        %v499 = vunpack.c.l.b16 %v491
        %v500 = vunpack.c.l.b16 %v492
        %v501 = vunpack.c.l.b16 %v493
        %v502 = vpack.c.b16 %v499, %v498
        %v503 = vpack.c.b16 %v501, %v500
        %vm506 = vcmask 261120
        %v508 = vsel %vm506, %v489, 0
        %510 = vmatprep.subr.bf16.mxu0 0
        %511 = vmatpush1.bf16.msra.mxu0 %v502
        %512 = vmatprep.subr.bf16.mxu0 0
        %513 = vmatpush1.bf16.msra.mxu0 %v503
        %514 = vmatprep.subr.bf16.mxu0 0
        %515 = vmatpush1.bf16.msra.mxu0 0
        %516 = vmatprep.subr.bf16.mxu0 0
        %517 = vmatpush1.bf16.msra.mxu0 0
        %518 = vmatprep.subr.bf16.mxu0 0
        %519 = vmatpush1.bf16.msra.mxu0 0
        %520 = vmatprep.subr.bf16.mxu0 0
        %521 = vmatpush1.bf16.msra.mxu0 0
        %522 = vmatprep.subr.bf16.mxu0 0
        %523 = vmatpush1.bf16.msra.mxu0 0
        %524 = vmatprep.subr.bf16.mxu0 0
        %525 = vmatpush1.bf16.msra.mxu0 0
        %526 = vmatprep.subr.bf16.mxu0 0
        %527 = vmatpush1.bf16.msra.mxu0 0
        %528 = vmatprep.subr.bf16.mxu0 0
        %529 = vmatpush1.bf16.msra.mxu0 0
        %530 = vmatprep.subr.bf16.mxu0 0
        %531 = vmatpush1.bf16.msra.mxu0 0
        %532 = vmatprep.subr.bf16.mxu0 0
        %533 = vmatpush1.bf16.msra.mxu0 0
        %534 = vmatprep.subr.bf16.mxu0 0
        %535 = vmatpush1.bf16.msra.mxu0 0
        %536 = vmatprep.subr.bf16.mxu0 0
        %537 = vmatpush1.bf16.msra.mxu0 0
        %538 = vmatprep.subr.bf16.mxu0 0
        %539 = vmatpush1.bf16.msra.mxu0 0
        %540 = vmatprep.subr.bf16.mxu0 0
        %541 = vmatpush1.bf16.msra.mxu0 0
        %542 = vmatprep.mubr.bf16.mxu0 0
        %543 = vmatmul.mubr.bf16.gmra.mrb[0].mxu0 %v508
        %v544 = vpop.f32.mrb[0].mxu0
        %v545 = vadd.f32 0.0, %v544
        %v546 = vpop.f32.mrb[0].mxu0
        %v547 = vpop.f32.mrb[0].mxu0
        %v548 = vpop.f32.mrb[0].mxu0
        %549 = vdwg.mxu0
        %v550 = vld [vmem:[%s2] sm:$0x1]
        %v551 = vld [vmem:[%s3] sm:$0x1]
        %v552 = vsel %vm506, %v545, 0.0
        %553 = vadd.xlane.f32.xlu0 %v552
        %v554 = vpop.xlane.xlu0 %553
        %v555 = vrcp.pop 32.0
        %v556 = vmul.f32 %v554, %v555
        %v557 = vsub.f32 %v545, %v556
        %v558 = vmul.f32 %v557, %v557
        %v559 = vsel %vm506, %v558, 0.0
        %560 = vadd.xlane.f32.xlu0 %v559
        %v561 = vpop.xlane.xlu0 %560
        %v562 = vmul.f32 %v561, %v555
        %v563 = vadd.f32 %v562, 1e-05
        %v564 = vrsqrt.pop %v563
        %v565 = vmul.f32 %v557, %v564
        %v567 = vlaneseq
        %v568 = vshrl.u32 %v567, 7
        %v569 = vsub.s32 0, %v568
        %v570 = vrot.slane %v550, %v569
        %v572 = vmul.f32 %v565, %v570
        %v574 = vlaneseq
        %v575 = vshrl.u32 %v574, 7
        %v576 = vsub.s32 0, %v575
        %v577 = vrot.slane %v551, %v576
        %v579 = vadd.f32 %v572, %v577
        %v580 = vld [vmem:[#allocation7] sm:$0x1]
        %v581 = vld [vmem:[#allocation8] sm:$0x1]
        %583 = vrot.lane.b32.xlu0 %v545, 96
        %v584 = vpop.permute.xlu0 %583
        %v586 = vsel %vm506, %v584, 0.0
        %587 = vadd.xlane.f32.xlu0 %v586
        %v588 = vpop.xlane.xlu0 %587
        %v589 = vmul.f32 %v588, %v555
        %v590 = vsub.f32 %v545, %v589
        %v591 = vmul.f32 %v590, %v590
        %593 = vrot.lane.b32.xlu0 %v591, 96
        %v594 = vpop.permute.xlu0 %593
        %v596 = vsel %vm506, %v594, 0.0
        %597 = vadd.xlane.f32.xlu0 %v596
        %v598 = vpop.xlane.xlu0 %597
        %v599 = vmul.f32 %v598, %v555
        %v600 = vadd.f32 %v599, 1e-05
        %v601 = vrsqrt.pop %v600
        %v602 = vmul.f32 %v590, %v601
        %v604 = vlaneseq
        %v605 = vshrl.u32 %v604, 7
        %v606 = vsub.s32 0, %v605
        %v607 = vrot.slane %v580, %v606
        %608 = vrot.lane.b32.xlu0 %v607, 32
        %v609 = vpop.permute.xlu0 %608
        %v611 = vmul.f32 %v602, %v609
        %v613 = vlaneseq
        %v614 = vshrl.u32 %v613, 7
        %v615 = vsub.s32 0, %v614
        %v616 = vrot.slane %v581, %v615
        %617 = vrot.lane.b32.xlu0 %v616, 32
        %v618 = vpop.permute.xlu0 %617
        %v620 = vadd.f32 %v611, %v618
        %v621 = vld [vmem:[%s483] sm:$0xff]
        %v622 = vld [vmem:[%s487] sm:$0xff]
        %v623 = vlaneseq
        %v624 = vand.u32 %v623, 127
        %vm625 = vcmp.lt.s32.totalorder %v624, 0
        %v626 = vsub.s32 0, %v624
        %v627 = vsel %vm625, %v626, %v624
        %v628 = vshrl.u32 %v627, 1
        %v629 = vand.u32 %v627, 1
        %v630 = vsub.s32 0, %v629
        %v631 = vsel %vm625, %v630, %v629
        %vm632 = vcmp.ne.s32.totalorder %v631, 0
        %vm633 = vcmp.lt.s32.totalorder %v631, 0
        %vm634 = vmand %vm633, %vm632
        %v635 = vadd.s32 %v631, 2
        %v636 = vsel %vm634, %v635, %v631
        %vm637 = vcmp.eq.s32.totalorder %v636, 0
        %639 = vrot.lane.b32.xlu0 %v579, 127
        %v640 = vpop.permute.xlu0 %639
        %642 = vrot.lane.b32.xlu0 %v579, 31
        %v643 = vpop.permute.xlu0 %642
        %vm645 = vcmask 252928
        %v646 = vsel %vm645, %v640, %v643
        %647 = vrot.lane.b32.xlu0 %v579, 97
        %v648 = vpop.permute.xlu0 %647
        %650 = vrot.lane.b32.xlu0 %v579, 1
        %v651 = vpop.permute.xlu0 %650
        %vm653 = vcmask 7168
        %v654 = vsel %vm653, %v648, %v651
        %v655 = vsel %vm637, %v646, %v654
        %v656 = vmul.f32 %v579, %v621
        %v657 = vmul.f32 %v655, %v622
        %v658 = vadd.f32 %v656, %v657
        %660 = vrot.lane.b32.xlu0 %v620, 95
        %v661 = vpop.permute.xlu0 %660
        %663 = vrot.lane.b32.xlu0 %v620, 127
        %v664 = vpop.permute.xlu0 %663
        %v666 = vsel %vm645, %v661, %v664
        %667 = vrot.lane.b32.xlu0 %v620, 65
        %v668 = vpop.permute.xlu0 %667
        %670 = vrot.lane.b32.xlu0 %v620, 97
        %v671 = vpop.permute.xlu0 %670
        %v673 = vsel %vm653, %v668, %v671
        %v674 = vsel %vm637, %v666, %v673
        %676 = vrot.lane.b32.xlu0 %v621, 32
        %v677 = vpop.permute.xlu0 %676
        %v679 = vmul.f32 %v620, %v677
        %v680 = vmul.f32 %v674, %v622
        %682 = vrot.lane.b32.xlu0 %v680, 32
        %v683 = vpop.permute.xlu0 %682
        %v685 = vadd.f32 %v679, %v683
        %v686 = vmul.f32 %v658, 0.35355338
        %v687 = vpack.c.bf16 %v686, %v686
        %vm688 = vcmask 60416
        %689 = vst.msk [vmem:[%s465] sm:$0xf] %vm688, %v687
        %v690 = vpack.c.bf16 %v685, %v685
        %v692 = vunpack.c.l.b16 %v690
        %v693 = vpack.c.b16 %v692, %v692
        %694 = vrot.lane.b32.xlu0 %v693, 96
        %v695 = vpop.permute.xlu0 %694
        %697 = vst.msk [vmem:[%s472] sm:$0xf] %vm688, %v695
        %v698 = vpack.c.bf16 %v545, %v545
        %v700 = vunpack.c.l.b16 %v698
        %v701 = vpack.c.b16 %v700, %v700
        %702 = vrot.lane.b32.xlu0 %v701, 64
        %v703 = vpop.permute.xlu0 %702
        %705 = vst.msk [vmem:[%s479] sm:$0xf] %vm688, %v703
        %v707 = vunpack.c.l.b16 %v687
        %v708 = vpack.c.b16 %v707, %v707
        %709 = vrot.lane.b32.xlu0 %v708, 120
        %v710 = vpop.permute.xlu0 %709
        %s712 = scalar_lea.vmem %s465, 4 [#allocation10]
        %713 = vst.msk [vmem:[%s712] sm:$0xf] %vm688, %v710
        %714 = vrot.lane.b32.xlu0 %v693, 88
        %v715 = vpop.permute.xlu0 %714
        %s717 = scalar_lea.vmem %s472, 4 [#allocation11]
        %718 = vst.msk [vmem:[%s717] sm:$0xf] %vm688, %v715
        %719 = vrot.lane.b32.xlu0 %v701, 56
        %v720 = vpop.permute.xlu0 %719
        %s722 = scalar_lea.vmem %s479, 4 [#allocation13]
        %723 = vst.msk [vmem:[%s722] sm:$0xf] %vm688, %v720
        %724 = vrot.lane.b32.xlu0 %v708, 112
        %v725 = vpop.permute.xlu0 %724
        %s727 = scalar_lea.vmem %s465, 8 [#allocation10]
        %728 = vst.msk [vmem:[%s727] sm:$0xf] %vm688, %v725
        %729 = vrot.lane.b32.xlu0 %v693, 80
        %v730 = vpop.permute.xlu0 %729
        %s732 = scalar_lea.vmem %s472, 8 [#allocation11]
        %733 = vst.msk [vmem:[%s732] sm:$0xf] %vm688, %v730
        %734 = vrot.lane.b32.xlu0 %v701, 48
        %v735 = vpop.permute.xlu0 %734
        %s737 = scalar_lea.vmem %s479, 8 [#allocation13]
        %738 = vst.msk [vmem:[%s737] sm:$0xf] %vm688, %v735
        %739 = vrot.lane.b32.xlu0 %v708, 104
        %v740 = vpop.permute.xlu0 %739
        %s742 = scalar_lea.vmem %s465, 12 [#allocation10]
        %743 = vst.msk [vmem:[%s742] sm:$0xf] %vm688, %v740
        %744 = vrot.lane.b32.xlu0 %v693, 72
        %v745 = vpop.permute.xlu0 %744
        %s747 = scalar_lea.vmem %s472, 12 [#allocation11]
        %748 = vst.msk [vmem:[%s747] sm:$0xf] %vm688, %v745
        %749 = vrot.lane.b32.xlu0 %v701, 40
        %v750 = vpop.permute.xlu0 %749
        %s752 = scalar_lea.vmem %s479, 12 [#allocation13]
        %753 = vst.msk [vmem:[%s752] sm:$0xf] %vm688, %v750
        %s754 = sand.u32 %s240, 1
        %s755 = scalar_lea.sflag [#allocation4], %s754
        %s756 = sand.u32 %s240, 1
        %s757 = smul.addr %s756, 16
        %s758 = scalar_lea.vmem [#allocation10], %s757
        %s759 = sand.u32 %s33, 1
        %s760 = scalar_lea.sflag [#allocation12], %s759
        %s761 = sand.u32 %s268, 1
        %s762 = smul.addr %s761, 16
        %s763 = scalar_lea.vmem [#allocation11], %s762
        %s764 = sand.u32 %s33, 1
        %s765 = scalar_lea.sflag [#allocation12], %s764
        %s766 = sand.u32 %s296, 1
        %s767 = smul.addr %s766, 16
        %s768 = scalar_lea.vmem [#allocation13], %s767
        // Predicated region
        $region69: #{tpu_custom_call.1} parent=51 // pred_check
          %p769 = pneg %p250
        $region70: #{tpu_custom_call.1} parent=51 // pred_check_branch
          %771 = sbr.rel (%p769) target = $region72
        $region71: #{tpu_custom_call.1} parent=51 // pred_region
          %s773 = ssub.s32 256, 256
          %774 = vsyncadd %s755, %s773
          %s775 = smul.addr %s37, 4
          %s776 = sadd.s32 %s38, %s775
          %s777 = smul.addr %s776, 64
          %s778 = scalar_lea.hbm %s8, %s777
          %s779 = sshll.u32 %s758, 4
          %s780 = int_to_ptr.vmem [resolvable:$true] %s779
          %785 = dma.vmem_to_hbm [thread:$0]  %s780, 256, %s778, %s755, 64, 64, 4
        $region72: #{tpu_custom_call.1} parent=51 // pred_fallthru
          _
        // Predicated region
        $region73: #{tpu_custom_call.1} parent=51 // pred_check
          %p786 = pneg %p278
        $region74: #{tpu_custom_call.1} parent=51 // pred_check_branch
          %788 = sbr.rel (%p786) target = $region76
        $region75: #{tpu_custom_call.1} parent=51 // pred_region
          %s790 = ssub.s32 256, 256
          %791 = vsyncadd %s760, %s790
          %s792 = smul.addr %s37, 4
          %s793 = sadd.s32 %s38, %s792
          %s794 = smul.addr %s793, 64
          %s795 = scalar_lea.hbm %s9, %s794
          %s796 = sshll.u32 %s763, 4
          %s797 = int_to_ptr.vmem [resolvable:$true] %s796
          %802 = dma.vmem_to_hbm [thread:$0]  %s797, 256, %s795, %s760, 64, 64, 4
        $region76: #{tpu_custom_call.1} parent=51 // pred_fallthru
          _
        // Predicated region
        $region77: #{tpu_custom_call.1} parent=51 // pred_check
          %p803 = pneg %p306
        $region78: #{tpu_custom_call.1} parent=51 // pred_check_branch
          %805 = sbr.rel (%p803) target = $region80
        $region79: #{tpu_custom_call.1} parent=51 // pred_region
          %s807 = ssub.s32 256, 256
          %808 = vsyncadd %s765, %s807
          %s809 = smul.addr %s37, 4
          %s810 = sadd.s32 %s38, %s809
          %s811 = smul.addr %s810, 64
          %s812 = scalar_lea.hbm %s10, %s811
          %s813 = sshll.u32 %s768, 4
          %s814 = int_to_ptr.vmem [resolvable:$true] %s813
          %819 = dma.vmem_to_hbm [thread:$0]  %s814, 256, %s812, %s765, 64, 64, 4
        $region80: #{tpu_custom_call.1} parent=51 // pred_fallthru
          _
      $region52: #{tpu_custom_call.1} parent=5 // pred_fallthru
        _
      %p820 = scmp.le.s32.totalorder 2, %s28
      // Predicated region
      $region81: #{tpu_custom_call.1} parent=5 // pred_check
        %p821 = pneg %p820
      $region82: #{tpu_custom_call.1} parent=5 // pred_check_branch
        %823 = sbr.rel (%p821) target = $region84
      $region83: #{tpu_custom_call.1} parent=5 // pred_region
        %s824 = ssub.s32 %s28, 2
        // Predicated region
        $region85: #{tpu_custom_call.1} parent=83 // pred_check
          %p825 = pneg %p256
        $region86: #{tpu_custom_call.1} parent=83 // pred_check_branch
          %827 = sbr.rel (%p825) target = $region88
        $region87: #{tpu_custom_call.1} parent=83 // pred_region
          %s828 = sand.u32 %s241, 1
          %s829 = scalar_lea.sflag [#allocation4], %s828
          %s830 = sand.u32 %s241, 1
          %s831 = smul.addr %s830, 16
          %s832 = scalar_lea.vmem [#allocation10], %s831
          %833 = dma.done %s829, 256
        $region88: #{tpu_custom_call.1} parent=83 // pred_fallthru
          _
        // Predicated region
        $region89: #{tpu_custom_call.1} parent=83 // pred_check
          %p834 = pneg %p284
        $region90: #{tpu_custom_call.1} parent=83 // pred_check_branch
          %836 = sbr.rel (%p834) target = $region92
        $region91: #{tpu_custom_call.1} parent=83 // pred_region
          %s837 = sand.u32 %s34, 1
          %s838 = scalar_lea.sflag [#allocation12], %s837
          %s839 = sand.u32 %s269, 1
          %s840 = smul.addr %s839, 16
          %s841 = scalar_lea.vmem [#allocation11], %s840
          %842 = dma.done %s838, 256
        $region92: #{tpu_custom_call.1} parent=83 // pred_fallthru
          _
        // Predicated region
        $region93: #{tpu_custom_call.1} parent=83 // pred_check
          %p843 = pneg %p312
        $region94: #{tpu_custom_call.1} parent=83 // pred_check_branch
          %845 = sbr.rel (%p843) target = $region96
        $region95: #{tpu_custom_call.1} parent=83 // pred_region
          %s846 = sand.u32 %s34, 1
          %s847 = scalar_lea.sflag [#allocation12], %s846
          %s848 = sand.u32 %s297, 1
          %s849 = smul.addr %s848, 16
          %s850 = scalar_lea.vmem [#allocation13], %s849
          %851 = dma.done %s847, 256
        $region96: #{tpu_custom_call.1} parent=83 // pred_fallthru
          _
      $region84: #{tpu_custom_call.1} parent=5 // pred_fallthru
        _
    $region6: #{tpu_custom_call.1} parent=1 // loop_footer
      %s32 = sadd.s32 1, %s28
    $region7: #{tpu_custom_call.1} parent=1 // loop_footer_branch
      %27 = sbr.rel target = $region3
    $region8: #{tpu_custom_call.1} parent=1 // loop_exit
      _
    %852 = vsyncpa [#allocation3], 1
    %s853 = scalar_lea.sflag [#allocation3], 1
    %854 = vsyncpa %s853, 1
    %855 = vsyncpa [#allocation6], 1
    %856 = vsyncpa [#allocation9], 1
    %857 = vsyncpa [#allocation4], 1
    %s858 = scalar_lea.sflag [#allocation4], 1
    %859 = vsyncpa %s858, 1
    %860 = vsyncpa [#allocation12], 1
    %s861 = scalar_lea.sflag [#allocation12], 1
    %862 = vsyncpa %s861, 1

</llo_original>
